<compile_context>
chip_gen: v5e
topology: v5e:2x2
jax: 0.10.0
libtpu: 0.0.40
codegen_flags: <defaults>
</compile_context>

<pallas_src>
import functools

import jax
import jax.numpy as jnp
from jax.experimental import pallas as pl
from jax.experimental.pallas import tpu as pltpu

LANES = 128


def _round_up(n, m):
    return ((n + m - 1) // m) * m


def char_rnn_step_kernel(
    x_ref,        # (B, H)      embedded input
    h_ref,        # (B, H)      previous hidden state
    wi_ref,       # (H, PADW)   fused input->gate weights  [W_ir | W_iz | W_in | 0-pad]
    wh_ref,       # (H, PADW)   fused hidden->gate weights [W_hr | W_hz | W_hn | 0-pad]
    bias_ref,     # (3, PADW)   packed/folded biases (see pack_params)
    wdec_ref,     # (H, PADW)   decoder weight, zero-padded on the lane axis
    logits_ref,   # (B, PADW)   output: lane-dense decoder-logits slab
    hnew_ref,     # (B, H)      output: new hidden state (aliased onto h_ref)
    *,
    hidden_size: int,
):
    H = hidden_size
    x = x_ref[...]
    h = h_ref[...]
    bias = bias_ref[...]

    # Fused GRU gate matmuls (PyTorch gate order r, z, n along the lane axis).
    gx = jnp.dot(x, wi_ref[...], preferred_element_type=jnp.float32) + bias[0:1, :]
    gh = jnp.dot(h, wh_ref[...], preferred_element_type=jnp.float32) + bias[1:2, :]

    #   r = sigmoid(W_ir x + b_ir + W_hr h + b_hr)         lanes [0, H)
    #   z = sigmoid(W_iz x + b_iz + W_hz h + b_hz)         lanes [H, 2H)
    #   n = tanh  (W_in x + b_in + r * (W_hn h + b_hn))    lanes [2H, 3H)
    rz = jax.nn.sigmoid(gx[:, : 2 * H] + gh[:, : 2 * H])
    r = rz[:, :H]
    z = rz[:, H : 2 * H]
    n = jnp.tanh(gx[:, 2 * H : 3 * H] + r * gh[:, 2 * H : 3 * H])

    # h' = (1 - z) * n + z * h  ==  n + z * (h - n)
    h_new = n + z * (h - n)
    hnew_ref[...] = h_new.astype(hnew_ref.dtype)

    # Decoder: logits = h' @ W_dec^T + b_dec  (lane-dense, padded to PADW).
    logits_ref[...] = (
        jnp.dot(h_new, wdec_ref[...], preferred_element_type=jnp.float32)
        + bias[2:3, :]
    ).astype(logits_ref.dtype)


def pack_params(p):
    """Fuse gate weights / fold biases into MXU- and lane-friendly slabs."""
    H = p["w_ir_t"].shape[0]
    O = p["b_dec"].shape[0]
    padw = max(_round_up(3 * H, LANES), _round_up(O, LANES))

    def fuse(a, b, c):
        w = jnp.zeros((H, padw), jnp.float32)
        w = w.at[:, 0:H].set(a)
        w = w.at[:, H : 2 * H].set(b)
        w = w.at[:, 2 * H : 3 * H].set(c)
        return w

    w_i = fuse(p["w_ir_t"], p["w_iz_t"], p["w_in_t"])
    w_h = fuse(p["w_hr_t"], p["w_hz_t"], p["w_hn_t"])
    w_dec = jnp.zeros((H, padw), jnp.float32).at[:, :O].set(p["w_dec_t"])

    bias = jnp.zeros((3, padw), jnp.float32)
    # r/z biases meet inside a single sigmoid, so they fold; b_in / b_hn stay
    # split because b_hn must remain inside the r-multiplied term.
    bias = bias.at[0, 0:H].set(p["b_ir"] + p["b_hr"])
    bias = bias.at[0, H : 2 * H].set(p["b_iz"] + p["b_hz"])
    bias = bias.at[0, 2 * H : 3 * H].set(p["b_in"])
    bias = bias.at[1, 2 * H : 3 * H].set(p["b_hn"])
    bias = bias.at[2, 0:O].set(p["b_dec"])

    return {
        "emb": p["emb"].astype(jnp.float32),
        "w_i": w_i,
        "w_h": w_h,
        "w_dec": w_dec,
        "bias": bias,
        "hidden_size": H,
        "output_size": O,
        "padded_width": padw,
    }


def char_rnn_forward(input_ids, hidden, packed):
    """Mirror of CharRNN.forward for model='gru', n_layers=1.

    input_ids: (B,) int32 token indices
    hidden:    (1, B, H) float32
    returns (logits (B, O), hidden (1, B, H))
    """
    B = input_ids.shape[0]
    H = packed["hidden_size"]
    O = packed["output_size"]
    padw = packed["padded_width"]

    # Embedding gather (glue, plain JAX).
    encoded = packed["emb"][input_ids]              # (B, H)
    h_prev = hidden[0].astype(jnp.float32)          # (B, H) fresh buffer (safe to alias)

    vmem = pl.BlockSpec(memory_space=pltpu.MemorySpace.VMEM)
    kernel = functools.partial(char_rnn_step_kernel, hidden_size=H)

    logits_pad, h_new = pl.pallas_call(
        kernel,
        out_shape=(
            jax.ShapeDtypeStruct((B, padw), jnp.float32),   # lane-dense logits slab
            jax.ShapeDtypeStruct((B, H), jnp.float32),
        ),
        in_specs=[vmem] * 6,
        out_specs=(vmem, vmem),
        input_output_aliases={1: 1},                        # h' overwrites h in place
    )(encoded, h_prev, packed["w_i"], packed["w_h"], packed["bias"], packed["w_dec"])

    return logits_pad[:, :O], h_new[None, :, :]             # hidden back to (1, B, H)


def make_params(key, vocab_size, hidden_size, output_size):
    """Deterministic synthetic parameters (stand-in for word2vec + GRU/Linear init)."""
    H, O, V = hidden_size, output_size, vocab_size
    ks = jax.random.split(key, 16)
    bound = 1.0 / jnp.sqrt(H)

    def u(k, shape):
        return jax.random.uniform(k, shape, jnp.float32, -bound, bound)

    return {
        # nn.Embedding.from_pretrained(word2vec_weights): (V, H)
        "emb": jax.random.normal(ks[0], (V, H), jnp.float32) * 0.1,
        # GRU weights, stored transposed (in, out) for x @ W
        "w_ir_t": u(ks[1], (H, H)), "w_iz_t": u(ks[2], (H, H)), "w_in_t": u(ks[3], (H, H)),
        "w_hr_t": u(ks[4], (H, H)), "w_hz_t": u(ks[5], (H, H)), "w_hn_t": u(ks[6], (H, H)),
        "b_ir": u(ks[7], (H,)), "b_iz": u(ks[8], (H,)), "b_in": u(ks[9], (H,)),
        "b_hr": u(ks[10], (H,)), "b_hz": u(ks[11], (H,)), "b_hn": u(ks[12], (H,)),
        # Decoder Linear(H, O), transposed to (H, O)
        "w_dec_t": u(ks[13], (H, O)),
        "b_dec": u(ks[14], (O,)),
    }


def reference_forward(input_ids, hidden, p):
    """Pure-JAX reference of the same math, from the *unpacked* params."""
    x = p["emb"][input_ids]
    h = hidden[0]
    r = jax.nn.sigmoid(x @ p["w_ir_t"] + p["b_ir"] + h @ p["w_hr_t"] + p["b_hr"])
    z = jax.nn.sigmoid(x @ p["w_iz_t"] + p["b_iz"] + h @ p["w_hz_t"] + p["b_hz"])
    n = jnp.tanh(x @ p["w_in_t"] + p["b_in"] + r * (h @ p["w_hn_t"] + p["b_hn"]))
    h_new = (1.0 - z) * n + z * h
    logits = h_new @ p["w_dec_t"] + p["b_dec"]
    return logits, h_new[None]


if __name__ == "__main__":
    # Small shapes consistent with CharRNN: vocab=64, hidden=32, output=64, batch=2.
    VOCAB, HIDDEN, OUTPUT, BATCH = 64, 32, 64, 2

    key = jax.random.PRNGKey(0)
    k_params, k_ids = jax.random.split(key)

    params = make_params(k_params, VOCAB, HIDDEN, OUTPUT)
    packed = pack_params(params)            # fuse/fold once, outside the step

    input_ids = jax.random.randint(k_ids, (BATCH,), 0, VOCAB, dtype=jnp.int32)
    hidden0 = jnp.zeros((1, BATCH, HIDDEN), jnp.float32)   # CharRNN.init_hidden

    forward = jax.jit(functools.partial(char_rnn_forward, packed=packed))
    logits, hidden1 = forward(input_ids, hidden0)
    logits = jax.block_until_ready(logits)
    hidden1 = jax.block_until_ready(hidden1)

    ref_logits, ref_hidden = reference_forward(input_ids, hidden0, params)
    assert logits.shape == (BATCH, OUTPUT)
    assert hidden1.shape == (1, BATCH, HIDDEN)
    assert jnp.allclose(logits, ref_logits, atol=1e-5, rtol=1e-5)
    assert jnp.allclose(hidden1, ref_hidden, atol=1e-5, rtol=1e-5)

    print("KERNEL_OK")
</pallas_src>

<mosaic_0001>
module attributes {stable_mosaic.version = 11 : i64} {
  func.func @char_rnn_step_kernel(%arg0: memref<2x32xf32, #tpu.memory_space<vmem>>, %arg1: memref<2x32xf32, #tpu.memory_space<vmem>>, %arg2: memref<32x128xf32, #tpu.memory_space<vmem>>, %arg3: memref<32x128xf32, #tpu.memory_space<vmem>>, %arg4: memref<3x128xf32, #tpu.memory_space<vmem>>, %arg5: memref<32x128xf32, #tpu.memory_space<vmem>>, %arg6: memref<2x128xf32, #tpu.memory_space<vmem>>, %arg7: memref<2x32xf32, #tpu.memory_space<vmem>>) attributes {dimension_semantics = [], scalar_prefetch = 0 : i64, scratch_operands = 0 : i64, tpu.core_type = #tpu.core_type<tc>} {
    %c0 = arith.constant 0 : index
    %c0_0 = arith.constant 0 : index
    %0 = vector.load %arg0[%c0, %c0_0] : memref<2x32xf32, #tpu.memory_space<vmem>>, vector<2x32xf32>
    %c0_1 = arith.constant 0 : index
    %c0_2 = arith.constant 0 : index
    %1 = vector.load %arg1[%c0_1, %c0_2] : memref<2x32xf32, #tpu.memory_space<vmem>>, vector<2x32xf32>
    %c0_3 = arith.constant 0 : index
    %c0_4 = arith.constant 0 : index
    %2 = vector.load %arg4[%c0_3, %c0_4] : memref<3x128xf32, #tpu.memory_space<vmem>>, vector<3x128xf32>
    %c0_5 = arith.constant 0 : index
    %c0_6 = arith.constant 0 : index
    %3 = vector.load %arg2[%c0_5, %c0_6] : memref<32x128xf32, #tpu.memory_space<vmem>>, vector<32x128xf32>
    %cst = arith.constant dense<0.000000e+00> : vector<2x128xf32>
    %4 = tpu.matmul %0, %3, %cst {dimension_numbers = #tpu.dot_dimension_numbers<[1], [0], [0], [1], [0, 0, 1, 1], [], []>} : vector<2x32xf32>, vector<32x128xf32>, vector<2x128xf32> -> vector<2x128xf32>
    %5 = vector.extract_strided_slice %2 {offsets = [0, 0], sizes = [1, 128], strides = [1, 1]} : vector<3x128xf32> to vector<1x128xf32>
    %6 = vector.broadcast %5 : vector<1x128xf32> to vector<2x128xf32>
    %7 = arith.addf %4, %6 : vector<2x128xf32>
    %c0_7 = arith.constant 0 : index
    %c0_8 = arith.constant 0 : index
    %8 = vector.load %arg3[%c0_7, %c0_8] : memref<32x128xf32, #tpu.memory_space<vmem>>, vector<32x128xf32>
    %cst_9 = arith.constant dense<0.000000e+00> : vector<2x128xf32>
    %9 = tpu.matmul %1, %8, %cst_9 {dimension_numbers = #tpu.dot_dimension_numbers<[1], [0], [0], [1], [0, 0, 1, 1], [], []>} : vector<2x32xf32>, vector<32x128xf32>, vector<2x128xf32> -> vector<2x128xf32>
    %10 = vector.extract_strided_slice %2 {offsets = [1, 0], sizes = [1, 128], strides = [1, 1]} : vector<3x128xf32> to vector<1x128xf32>
    %11 = vector.broadcast %10 : vector<1x128xf32> to vector<2x128xf32>
    %12 = arith.addf %9, %11 : vector<2x128xf32>
    %13 = vector.extract_strided_slice %7 {offsets = [0, 0], sizes = [2, 64], strides = [1, 1]} : vector<2x128xf32> to vector<2x64xf32>
    %14 = vector.extract_strided_slice %12 {offsets = [0, 0], sizes = [2, 64], strides = [1, 1]} : vector<2x128xf32> to vector<2x64xf32>
    %15 = arith.addf %13, %14 : vector<2x64xf32>
    %16 = arith.negf %15 : vector<2x64xf32>
    %17 = math.exp %16 : vector<2x64xf32>
    %cst_10 = arith.constant 1.000000e+00 : f32
    %18 = vector.broadcast %cst_10 : f32 to vector<2x64xf32>
    %19 = arith.addf %18, %17 : vector<2x64xf32>
    %20 = arith.divf %18, %19 : vector<2x64xf32>
    %21 = vector.extract_strided_slice %20 {offsets = [0, 0], sizes = [2, 32], strides = [1, 1]} : vector<2x64xf32> to vector<2x32xf32>
    %22 = vector.extract_strided_slice %20 {offsets = [0, 32], sizes = [2, 32], strides = [1, 1]} : vector<2x64xf32> to vector<2x32xf32>
    %23 = vector.extract_strided_slice %7 {offsets = [0, 64], sizes = [2, 32], strides = [1, 1]} : vector<2x128xf32> to vector<2x32xf32>
    %24 = vector.extract_strided_slice %12 {offsets = [0, 64], sizes = [2, 32], strides = [1, 1]} : vector<2x128xf32> to vector<2x32xf32>
    %25 = arith.mulf %21, %24 : vector<2x32xf32>
    %26 = arith.addf %23, %25 : vector<2x32xf32>
    %27 = math.tanh %26 : vector<2x32xf32>
    %28 = arith.subf %1, %27 : vector<2x32xf32>
    %29 = arith.mulf %22, %28 : vector<2x32xf32>
    %30 = arith.addf %27, %29 : vector<2x32xf32>
    %c0_11 = arith.constant 0 : index
    %c0_12 = arith.constant 0 : index
    %31 = vector.load %arg7[%c0_11, %c0_12] : memref<2x32xf32, #tpu.memory_space<vmem>>, vector<2x32xf32>
    tpu.vector_store %arg7[%c0_11, %c0_12], %30 {strides = array<i32>} : memref<2x32xf32, #tpu.memory_space<vmem>>, vector<2x32xf32>,
    %c0_13 = arith.constant 0 : index
    %c0_14 = arith.constant 0 : index
    %32 = vector.load %arg5[%c0_13, %c0_14] : memref<32x128xf32, #tpu.memory_space<vmem>>, vector<32x128xf32>
    %cst_15 = arith.constant dense<0.000000e+00> : vector<2x128xf32>
    %33 = tpu.matmul %30, %32, %cst_15 {dimension_numbers = #tpu.dot_dimension_numbers<[1], [0], [0], [1], [0, 0, 1, 1], [], []>} : vector<2x32xf32>, vector<32x128xf32>, vector<2x128xf32> -> vector<2x128xf32>
    %34 = vector.extract_strided_slice %2 {offsets = [2, 0], sizes = [1, 128], strides = [1, 1]} : vector<3x128xf32> to vector<1x128xf32>
    %35 = vector.broadcast %34 : vector<1x128xf32> to vector<2x128xf32>
    %36 = arith.addf %33, %35 : vector<2x128xf32>
    %c0_16 = arith.constant 0 : index
    %c0_17 = arith.constant 0 : index
    %37 = vector.load %arg6[%c0_16, %c0_17] : memref<2x128xf32, #tpu.memory_space<vmem>>, vector<2x128xf32>
    tpu.vector_store %arg6[%c0_16, %c0_17], %36 {strides = array<i32>} : memref<2x128xf32, #tpu.memory_space<vmem>>, vector<2x128xf32>,
    return
  }
}

</mosaic_0001>

<llo_original>
// kernel: char_rnn_forward.1
$region0: #{char_rnn_forward.1}
  #allocation0 [shape = 'u32[]', space=smem, size = 0x4, offset = 0x4, fixed_abs, tag = 'smem constant byte address 0x4 - core index']
  #allocation1 [shape = 'u32[72,128]{1,0:T(1,128)}', space=vmem, size = 0x9000, scoped, tag = 'internal scratch']
  %s0 = inlined_call_operand.vmem [shape: f32[2,32], index: 0, kind: input, shape index: {}]
  %s1 = inlined_call_operand.vmem [shape: f32[2,32], index: 1, kind: input, shape index: {}, may-alias: {1,7}]
  %s2 = inlined_call_operand.hbm [shape: f32[32,128], index: 2, kind: input, shape index: {}]
  %s3 = inlined_call_operand.hbm [shape: f32[32,128], index: 3, kind: input, shape index: {}]
  %s4 = inlined_call_operand.vmem [shape: f32[3,128], index: 4, kind: input, shape index: {}]
  %s5 = inlined_call_operand.hbm [shape: f32[32,128], index: 5, kind: input, shape index: {}]
  %s6 = inlined_call_operand.hbm [shape: f32[2,128], index: 6, kind: output, shape index: {0}]
  %s7 = inlined_call_operand.vmem [shape: f32[2,32], index: 7, kind: output, shape index: {1}, may-alias: {1,7}]
  %8 = xla_tuple %s6, %s7
  %s9 = sld [smem:[#allocation0]]
  $region54: #{char_rnn_forward.1} parent=0
    _
  %s11 = ssub.s32 1, %s9
  %s12 = scalar_select 0, %s11, %s9
  $region1: #{char_rnn_forward.1} parent=0
    #allocation2 [shape = 'u8[16384]{0}', space=vmem, size = 0x4000, scoped, tag = 'input window, operand 2, single buffered']
    #allocation3 [shape = 's32[1]{0}', space=sflag, size = 0x4, scoped, tag = 'scoped memory for char_rnn_forward.1']
    #allocation4 [shape = 's32[1]{0}', space=sflag, size = 0x4, scoped, tag = 'scoped memory for char_rnn_forward.1']
    #allocation5 [shape = 'u8[16384]{0}', space=vmem, size = 0x4000, scoped, tag = 'input window, operand 3, single buffered']
    #allocation6 [shape = 's32[1]{0}', space=sflag, size = 0x4, scoped, tag = 'scoped memory for char_rnn_forward.1']
    #allocation7 [shape = 'u8[16384]{0}', space=vmem, size = 0x4000, scoped, tag = 'input window, operand 5, single buffered']
    #allocation8 [shape = 'u8[1024]{0}', space=vmem, size = 0x400, scoped, tag = 'output window, operand 0, single buffered']
    %13 = vsyncpa [#allocation3], 0
    %14 = vsyncpa [#allocation6], 0
    %15 = vsyncpa [#allocation4], 0
    // Predicated region
    $region2: #{char_rnn_forward.1} parent=1 // pred_check
      _
    $region3: #{char_rnn_forward.1} parent=1 // pred_check_branch
      %17 = sbr.rel (0) target = $region5
    $region4: #{char_rnn_forward.1} parent=1 // pred_region
      _
    $region5: #{char_rnn_forward.1} parent=1 // pred_fallthru
      _
    // Predicated region
    $region6: #{char_rnn_forward.1} parent=1 // pred_check
      _
    $region7: #{char_rnn_forward.1} parent=1 // pred_check_branch
      %19 = sbr.rel (0) target = $region9
    $region8: #{char_rnn_forward.1} parent=1 // pred_region
      _
    $region9: #{char_rnn_forward.1} parent=1 // pred_fallthru
      _
    // Predicated region
    $region10: #{char_rnn_forward.1} parent=1 // pred_check
      _
    $region11: #{char_rnn_forward.1} parent=1 // pred_check_branch
      %21 = sbr.rel (0) target = $region13
    $region12: #{char_rnn_forward.1} parent=1 // pred_region
      %23 = vsyncadd [#allocation3], 0
      %s24 = sshll.u32 %s2, 4
      %s25 = int_to_ptr.hbm [resolvable:$true] %s24
      %s26 = sshll.u32 [#allocation2], 4
      %s27 = int_to_ptr.vmem [resolvable:$true] %s26
      %32 = dma.hbm_to_vmem [thread:$0]  %s25, 512, %s27, [#allocation3], 128, 128, 8
    $region13: #{char_rnn_forward.1} parent=1 // pred_fallthru
      _
    // Predicated region
    $region14: #{char_rnn_forward.1} parent=1 // pred_check
      _
    $region15: #{char_rnn_forward.1} parent=1 // pred_check_branch
      %34 = sbr.rel (0) target = $region17
    $region16: #{char_rnn_forward.1} parent=1 // pred_region
      %36 = vsyncadd [#allocation6], 0
      %s37 = sshll.u32 %s3, 4
      %s38 = int_to_ptr.hbm [resolvable:$true] %s37
      %s39 = sshll.u32 [#allocation5], 4
      %s40 = int_to_ptr.vmem [resolvable:$true] %s39
      %45 = dma.hbm_to_vmem [thread:$0]  %s38, 512, %s40, [#allocation6], 128, 128, 8
    $region17: #{char_rnn_forward.1} parent=1 // pred_fallthru
      _
    // Predicated region
    $region18: #{char_rnn_forward.1} parent=1 // pred_check
      _
    $region19: #{char_rnn_forward.1} parent=1 // pred_check_branch
      %47 = sbr.rel (0) target = $region21
    $region20: #{char_rnn_forward.1} parent=1 // pred_region
      _
    $region21: #{char_rnn_forward.1} parent=1 // pred_fallthru
      _
    // Predicated region
    $region22: #{char_rnn_forward.1} parent=1 // pred_check
      _
    $region23: #{char_rnn_forward.1} parent=1 // pred_check_branch
      %49 = sbr.rel (0) target = $region25
    $region24: #{char_rnn_forward.1} parent=1 // pred_region
      %51 = vsyncadd [#allocation6], 0
      %s52 = sshll.u32 %s5, 4
      %s53 = int_to_ptr.hbm [resolvable:$true] %s52
      %s54 = sshll.u32 [#allocation7], 4
      %s55 = int_to_ptr.vmem [resolvable:$true] %s54
      %60 = dma.hbm_to_vmem [thread:$0]  %s53, 512, %s55, [#allocation6], 128, 128, 8
    $region25: #{char_rnn_forward.1} parent=1 // pred_fallthru
      _
    // Predicated region
    $region26: #{char_rnn_forward.1} parent=1 // pred_check
      _
    $region27: #{char_rnn_forward.1} parent=1 // pred_check_branch
      %62 = sbr.rel (0) target = $region29
    $region28: #{char_rnn_forward.1} parent=1 // pred_region
      %64 = dma.done [#allocation3], 512
    $region29: #{char_rnn_forward.1} parent=1 // pred_fallthru
      _
    // Predicated region
    $region30: #{char_rnn_forward.1} parent=1 // pred_check
      _
    $region31: #{char_rnn_forward.1} parent=1 // pred_check_branch
      %66 = sbr.rel (0) target = $region33
    $region32: #{char_rnn_forward.1} parent=1 // pred_region
      %68 = dma.done [#allocation6], 512
    $region33: #{char_rnn_forward.1} parent=1 // pred_fallthru
      _
    // Predicated region
    $region34: #{char_rnn_forward.1} parent=1 // pred_check
      _
    $region35: #{char_rnn_forward.1} parent=1 // pred_check_branch
      %70 = sbr.rel (0) target = $region37
    $region36: #{char_rnn_forward.1} parent=1 // pred_region
      %72 = dma.done [#allocation6], 512
    $region37: #{char_rnn_forward.1} parent=1 // pred_fallthru
      _
    %v73 = vld [vmem:[%s0] sm:$0x3]
    %v74 = vld [vmem:[%s1] sm:$0x3]
    %v75 = vld [vmem:[%s4] sm:$0x7]
    %v76 = vld [vmem:[#allocation2] sm:$0xff]
    %v77 = vld [vmem:[#allocation2 + $0x8] sm:$0xff]
    %v78 = vld [vmem:[#allocation2 + $0x10] sm:$0xff]
    %v79 = vld [vmem:[#allocation2 + $0x18] sm:$0xff]
    %v80 = vperm.slane %v75, 0
    %vm81 = vcmask 261120
    %v83 = vsel %vm81, %v73, 0
    %85 = vmatpush.msra.mxu0 0.0
    %86 = vmatpush.msra.mxu0 0.0
    %87 = vmatpush.msra.mxu0 0.0
    %88 = vmatpush.msra.mxu0 0.0
    %89 = vmatpush.msra.mxu0 0.0
    %90 = vmatpush.msra.mxu0 0.0
    %91 = vmatpush.msra.mxu0 0.0
    %92 = vmatpush.msra.mxu0 0.0
    %93 = vmatpush.msra.mxu0 0.0
    %94 = vmatpush.msra.mxu0 0.0
    %95 = vmatpush.msra.mxu0 0.0
    %96 = vmatpush.msra.mxu0 0.0
    %97 = vmatpush.msra.mxu0 %v79
    %98 = vmatpush.msra.mxu0 %v78
    %99 = vmatpush.msra.mxu0 %v77
    %100 = vmatpush.msra.mxu0 %v76
    %101 = vmatmul.f32.gmra.mxu0 %v83
    %v102 = vpop.f32.mrf.mxu0
    %v103 = vadd.f32 %v80, %v102
    %104 = vdwg.mxu0
    %v105 = vld [vmem:[#allocation5] sm:$0xff]
    %v106 = vld [vmem:[#allocation5 + $0x8] sm:$0xff]
    %v107 = vld [vmem:[#allocation5 + $0x10] sm:$0xff]
    %v108 = vld [vmem:[#allocation5 + $0x18] sm:$0xff]
    %v109 = vperm.slane %v75, 1
    %v111 = vsel %vm81, %v74, 0
    %113 = vmatpush.msra.mxu0 0.0
    %114 = vmatpush.msra.mxu0 0.0
    %115 = vmatpush.msra.mxu0 0.0
    %116 = vmatpush.msra.mxu0 0.0
    %117 = vmatpush.msra.mxu0 0.0
    %118 = vmatpush.msra.mxu0 0.0
    %119 = vmatpush.msra.mxu0 0.0
    %120 = vmatpush.msra.mxu0 0.0
    %121 = vmatpush.msra.mxu0 0.0
    %122 = vmatpush.msra.mxu0 0.0
    %123 = vmatpush.msra.mxu0 0.0
    %124 = vmatpush.msra.mxu0 0.0
    %125 = vmatpush.msra.mxu0 %v108
    %126 = vmatpush.msra.mxu0 %v107
    %127 = vmatpush.msra.mxu0 %v106
    %128 = vmatpush.msra.mxu0 %v105
    %129 = vmatmul.f32.gmra.mxu0 %v111
    %v130 = vpop.f32.mrf.mxu0
    %v131 = vadd.f32 %v109, %v130
    %132 = vdwg.mxu0
    %v133 = vadd.f32 %v103, %v131
    %v134 = vxor.u32 %v133, 2147483648
    %v135 = vmul.f32 %v134, 1.442695
    %v136 = vpow.pop %v135
    %v137 = vadd.f32 %v136, 1.0
    %v138 = vrcp.pop %v137
    %v139 = vmul.f32 %v137, %v138
    %v140 = vsub.f32 1.0, %v139
    %v141 = vmul.f32 %v138, %v140
    %v142 = vadd.f32 %v138, %v141
    %vm143 = vweird.f32 %v137
    %vm144 = vweird.f32 %v138
    %vm145 = vmor %vm143, %vm144
    %v146 = vsel %vm145, %v138, %v142
    %v147 = vand.u32 2147483647, %v137
    %vm148 = vcmp.eq.f32.partialorder %v147, 8.507059e+37
    %v149 = vand.u32 %v137, 2147483648
    %v150 = vor.u32 1.1754944e-38, %v149
    %v151 = vsel %vm148, %v150, %v146
    %v152 = vmul.f32 1.0, %v151
    %154 = vrot.lane.b32.xlu0 %v131, 64
    %v155 = vpop.permute.xlu0 %154
    %v157 = vmul.f32 %v152, %v155
    %159 = vrot.lane.b32.xlu0 %v157, 64
    %v160 = vpop.permute.xlu0 %159
    %v162 = vadd.f32 %v103, %v160
    %v163 = vtanh.pop %v162
    %165 = vrot.lane.b32.xlu0 %v163, 64
    %v166 = vpop.permute.xlu0 %165
    %v168 = vsub.f32 %v74, %v166
    %170 = vrot.lane.b32.xlu0 %v168, 32
    %v171 = vpop.permute.xlu0 %170
    %v173 = vmul.f32 %v152, %v171
    %175 = vrot.lane.b32.xlu0 %v173, 32
    %v176 = vpop.permute.xlu0 %175
    %v178 = vadd.f32 %v163, %v176
    %180 = vrot.lane.b32.xlu0 %v178, 64
    %v181 = vpop.permute.xlu0 %180
    %vm183 = vcmask 254976
    %184 = vst.msk [vmem:[%s7] sm:$0x3] %vm183, %v181
    %v185 = vld [vmem:[#allocation7] sm:$0xff]
    %v186 = vld [vmem:[#allocation7 + $0x8] sm:$0xff]
    %v187 = vld [vmem:[#allocation7 + $0x10] sm:$0xff]
    %v188 = vld [vmem:[#allocation7 + $0x18] sm:$0xff]
    %v189 = vperm.slane %v75, 2
    %v190 = vsel %vm81, %v181, 0
    %192 = vmatpush.msra.mxu0 0.0
    %193 = vmatpush.msra.mxu0 0.0
    %194 = vmatpush.msra.mxu0 0.0
    %195 = vmatpush.msra.mxu0 0.0
    %196 = vmatpush.msra.mxu0 0.0
    %197 = vmatpush.msra.mxu0 0.0
    %198 = vmatpush.msra.mxu0 0.0
    %199 = vmatpush.msra.mxu0 0.0
    %200 = vmatpush.msra.mxu0 0.0
    %201 = vmatpush.msra.mxu0 0.0
    %202 = vmatpush.msra.mxu0 0.0
    %203 = vmatpush.msra.mxu0 0.0
    %204 = vmatpush.msra.mxu0 %v188
    %205 = vmatpush.msra.mxu0 %v187
    %206 = vmatpush.msra.mxu0 %v186
    %207 = vmatpush.msra.mxu0 %v185
    %208 = vmatmul.f32.gmra.mxu0 %v190
    %v209 = vpop.f32.mrf.mxu0
    %v210 = vadd.f32 %v189, %v209
    %211 = vdwg.mxu0
    %212 = vst [vmem:[#allocation8] sm:$0x3] %v210
    // Predicated region
    $region38: #{char_rnn_forward.1} parent=1 // pred_check
      _
    $region39: #{char_rnn_forward.1} parent=1 // pred_check_branch
      %214 = sbr.rel (0) target = $region41
    $region40: #{char_rnn_forward.1} parent=1 // pred_region
      %216 = vsyncadd [#allocation4], 0
      %s218 = sshll.u32 [#allocation8], 4
      %s219 = int_to_ptr.vmem [resolvable:$true] %s218
      %s220 = sshll.u32 %s6, 4
      %s221 = int_to_ptr.hbm [resolvable:$true] %s220
      %223 = dma.vmem_to_hbm [thread:$0]  %s219, 32, %s221, [#allocation4]
    $region41: #{char_rnn_forward.1} parent=1 // pred_fallthru
      _
    // Predicated region
    $region42: #{char_rnn_forward.1} parent=1 // pred_check
      _
    $region43: #{char_rnn_forward.1} parent=1 // pred_check_branch
      %225 = sbr.rel (0) target = $region45
    $region44: #{char_rnn_forward.1} parent=1 // pred_region
      _
    $region45: #{char_rnn_forward.1} parent=1 // pred_fallthru
      _
    // Predicated region
    $region46: #{char_rnn_forward.1} parent=1 // pred_check
      _
    $region47: #{char_rnn_forward.1} parent=1 // pred_check_branch
      %227 = sbr.rel (0) target = $region49
    $region48: #{char_rnn_forward.1} parent=1 // pred_region
      %229 = dma.done [#allocation4], 32
    $region49: #{char_rnn_forward.1} parent=1 // pred_fallthru
      _
    // Predicated region
    $region50: #{char_rnn_forward.1} parent=1 // pred_check
      _
    $region51: #{char_rnn_forward.1} parent=1 // pred_check_branch
      %231 = sbr.rel (0) target = $region53
    $region52: #{char_rnn_forward.1} parent=1 // pred_region
      _
    $region53: #{char_rnn_forward.1} parent=1 // pred_fallthru
      _
    %232 = vsyncpa [#allocation3], 1
    %233 = vsyncpa [#allocation6], 1
    %234 = vsyncpa [#allocation4], 1

</llo_original>
